<compile_context>
chip_gen: v5e
topology: v5e:2x2
jax: 0.10.0
libtpu: 0.0.40
codegen_flags: <defaults>
</compile_context>

<pallas_src>
import functools

import jax
import jax.numpy as jnp
from jax.experimental import pallas as pl
from jax.experimental.pallas import tpu as pltpu


def _bn_pad_kernel(scale_ref, shift_ref, padv_ref, x_ref, o_ref, *, pad, H, W):
    # Block shapes (all VMEM):
    #   scale/shift/padv: (1, C_blk, 1, 1)
    #   x_ref:            (1, C_blk, H, W)
    #   o_ref:            (1, C_blk, H + 2*pad, W + 2*pad)
    y = (x_ref[...] * scale_ref[...] + shift_ref[...]).astype(o_ref.dtype)

    if pad == 0:
        # Static (trace-time) branch: no border, plain elementwise BN.
        o_ref[...] = y
        return

    c_blk = o_ref.shape[1]
    Ho = H + 2 * pad
    Wo = W + 2 * pad
    pv = padv_ref[...].astype(o_ref.dtype)  # (1, C_blk, 1, 1)

    # Top / bottom full-width pad bands (each element written once).
    band = jnp.broadcast_to(pv, (1, c_blk, pad, Wo))
    o_ref[:, :, pl.ds(0, pad), :] = band
    o_ref[:, :, pl.ds(Ho - pad, pad), :] = band

    # Left / right pad-column strips for the middle rows.
    side = jnp.broadcast_to(pv, (1, c_blk, H, pad))
    o_ref[:, :, pl.ds(pad, H), pl.ds(0, pad)] = side
    o_ref[:, :, pl.ds(pad, H), pl.ds(Wo - pad, pad)] = side

    # Normalized interior, stored exactly once.
    o_ref[:, :, pl.ds(pad, H), pl.ds(pad, W)] = y


# Conservative budgets that are safe on all generations (v7x has only 64 MiB physical VMEM).
_VMEM_BLOCK_BUDGET = 24 * 1024 * 1024   # bytes for double-buffered in+out blocks
_VMEM_LIMIT_BYTES = 48 * 1024 * 1024    # > default scoped limit (16/32 MiB), < 64 MiB v7x physical


def _pick_c_block(C, H, W, Ho, Wo, itemsize):
    # Double-buffered input + output block bytes per channel.
    per_c = 2 * (H * W + Ho * Wo) * itemsize
    max_c = max(1, _VMEM_BLOCK_BUDGET // per_c)
    # Largest divisor of C that fits the budget (keeps the grid exact).
    c_blk = 1
    for d in range(1, C + 1):
        if C % d == 0 and d <= max_c:
            c_blk = d
    return c_blk


def bn_and_pad(x, weight, bias, running_mean, running_var, *, eps=1e-5, pad_pixels=1,
               affine=True):
    """Eval-mode BatchNorm2d followed by constant (per-channel) border padding.

    x: (N, C, H, W)
    weight/bias/running_mean/running_var: (C,)
    Returns: (N, C, H + 2*pad_pixels, W + 2*pad_pixels) with x.dtype.
    """
    N, C, H, W = x.shape
    p = int(pad_pixels)
    Ho, Wo = H + 2 * p, W + 2 * p

    inv_std = 1.0 / jnp.sqrt(running_var.astype(jnp.float32) + eps)
    if affine:
        scale = weight.astype(jnp.float32) * inv_std
        shift = bias.astype(jnp.float32) - running_mean.astype(jnp.float32) * scale
    else:
        scale = inv_std
        shift = -running_mean.astype(jnp.float32) * inv_std
    # PyTorch pad value: bias - running_mean * weight / sqrt(var + eps) == shift
    # (same expression for the non-affine case).
    pad_values = shift

    scale4 = scale.reshape(1, C, 1, 1)
    shift4 = shift.reshape(1, C, 1, 1)
    padv4 = pad_values.reshape(1, C, 1, 1)

    itemsize = jnp.dtype(x.dtype).itemsize
    c_blk = _pick_c_block(C, H, W, Ho, Wo, itemsize)

    kernel = functools.partial(_bn_pad_kernel, pad=p, H=H, W=W)

    param_spec = pl.BlockSpec((1, c_blk, 1, 1), lambda n, cb: (0, cb, 0, 0))

    out = pl.pallas_call(
        kernel,
        out_shape=jax.ShapeDtypeStruct((N, C, Ho, Wo), x.dtype),
        grid=(N, C // c_blk),
        in_specs=[
            param_spec,  # scale   (1, C, 1, 1)
            param_spec,  # shift   (1, C, 1, 1)
            param_spec,  # pad val (1, C, 1, 1)
            pl.BlockSpec((1, c_blk, H, W), lambda n, cb: (n, cb, 0, 0)),
        ],
        out_specs=pl.BlockSpec((1, c_blk, Ho, Wo), lambda n, cb: (n, cb, 0, 0)),
        compiler_params=pltpu.CompilerParams(
            dimension_semantics=("parallel", "parallel"),
            vmem_limit_bytes=_VMEM_LIMIT_BYTES,
        ),
    )(scale4, shift4, padv4, x)
    return out


def _reference(x, weight, bias, running_mean, running_var, eps, pad_pixels):
    # Pure-JAX reference reproducing the PyTorch forward (eval-mode BN).
    inv_std = 1.0 / jnp.sqrt(running_var + eps)
    y = (x - running_mean[None, :, None, None]) * inv_std[None, :, None, None]
    y = y * weight[None, :, None, None] + bias[None, :, None, None]
    if pad_pixels > 0:
        pv = bias - running_mean * weight * inv_std
        p = pad_pixels
        y = jnp.pad(y, ((0, 0), (0, 0), (p, p), (p, p)))
        pvb = pv[None, :, None, None]
        y = y.at[:, :, 0:p, :].set(pvb)
        y = y.at[:, :, -p:, :].set(pvb)
        y = y.at[:, :, :, 0:p].set(pvb)
        y = y.at[:, :, :, -p:].set(pvb)
    return y


if __name__ == "__main__":
    key = jax.random.PRNGKey(0)
    N, C, H, W = 2, 4, 16, 16
    eps = 1e-5

    kx, kw, kb, km, kv = jax.random.split(key, 5)
    x = jax.random.normal(kx, (N, C, H, W), dtype=jnp.float32)

    # Deterministic synthetic BN parameters / running statistics.
    weight = 1.0 + 0.1 * jax.random.normal(kw, (C,), dtype=jnp.float32)
    bias = 0.1 * jax.random.normal(kb, (C,), dtype=jnp.float32)
    running_mean = 0.05 * jax.random.normal(km, (C,), dtype=jnp.float32)
    running_var = 1.0 + 0.1 * jax.random.uniform(kv, (C,), dtype=jnp.float32)

    # pad_pixels > 0 path (matches BNAndPadLayer(pad_pixels=2, ...)).
    pad_pixels = 2
    out = bn_and_pad(x, weight, bias, running_mean, running_var,
                     eps=eps, pad_pixels=pad_pixels, affine=True)
    out = jax.block_until_ready(out)
    ref = _reference(x, weight, bias, running_mean, running_var, eps, pad_pixels)
    assert out.shape == (N, C, H + 2 * pad_pixels, W + 2 * pad_pixels)
    assert jnp.allclose(out, ref, atol=1e-5, rtol=1e-5), "mismatch vs reference (pad=2)"

    # pad_pixels == 0 path (trace-time branch: plain eval-mode BN).
    out0 = bn_and_pad(x, weight, bias, running_mean, running_var,
                      eps=eps, pad_pixels=0, affine=True)
    out0 = jax.block_until_ready(out0)
    ref0 = _reference(x, weight, bias, running_mean, running_var, eps, 0)
    assert out0.shape == (N, C, H, W)
    assert jnp.allclose(out0, ref0, atol=1e-5, rtol=1e-5), "mismatch vs reference (pad=0)"

    print("KERNEL_OK")
</pallas_src>

<mosaic_0001>
module attributes {stable_mosaic.version = 11 : i64} {
  func.func @_bn_pad_kernel(%arg0: i32, %arg1: i32, %arg2: memref<1x4x1x1xf32, #tpu.memory_space<vmem>>, %arg3: memref<1x4x1x1xf32, #tpu.memory_space<vmem>>, %arg4: memref<1x4x1x1xf32, #tpu.memory_space<vmem>>, %arg5: memref<1x4x16x16xf32, #tpu.memory_space<vmem>>, %arg6: memref<1x4x20x20xf32, #tpu.memory_space<vmem>>) attributes {dimension_semantics = [#tpu.dimension_semantics<parallel>, #tpu.dimension_semantics<parallel>], iteration_bounds = array<i64: 2, 1>, scalar_prefetch = 0 : i64, scratch_operands = 0 : i64, tpu.core_type = #tpu.core_type<tc>, window_params = [{transform_indices = @transform_0, window_bounds = array<i64: 1, 4, 1, 1>}, {transform_indices = @transform_1, window_bounds = array<i64: 1, 4, 1, 1>}, {transform_indices = @transform_2, window_bounds = array<i64: 1, 4, 1, 1>}, {transform_indices = @transform_3, window_bounds = array<i64: 1, 4, 16, 16>}, {transform_indices = @transform_4, window_bounds = array<i64: 1, 4, 20, 20>}]} {
    %c0 = arith.constant 0 : index
    %c0_0 = arith.constant 0 : index
    %c0_1 = arith.constant 0 : index
    %c0_2 = arith.constant 0 : index
    %0 = vector.load %arg5[%c0, %c0_0, %c0_1, %c0_2] : memref<1x4x16x16xf32, #tpu.memory_space<vmem>>, vector<1x4x16x16xf32>
    %c0_3 = arith.constant 0 : index
    %c0_4 = arith.constant 0 : index
    %c0_5 = arith.constant 0 : index
    %c0_6 = arith.constant 0 : index
    %1 = vector.load %arg2[%c0_3, %c0_4, %c0_5, %c0_6] : memref<1x4x1x1xf32, #tpu.memory_space<vmem>>, vector<1x4x1x1xf32>
    %2 = vector.broadcast %1 : vector<1x4x1x1xf32> to vector<1x4x16x16xf32>
    %3 = arith.mulf %0, %2 : vector<1x4x16x16xf32>
    %c0_7 = arith.constant 0 : index
    %c0_8 = arith.constant 0 : index
    %c0_9 = arith.constant 0 : index
    %c0_10 = arith.constant 0 : index
    %4 = vector.load %arg3[%c0_7, %c0_8, %c0_9, %c0_10] : memref<1x4x1x1xf32, #tpu.memory_space<vmem>>, vector<1x4x1x1xf32>
    %5 = vector.broadcast %4 : vector<1x4x1x1xf32> to vector<1x4x16x16xf32>
    %6 = arith.addf %3, %5 : vector<1x4x16x16xf32>
    %c0_11 = arith.constant 0 : index
    %c0_12 = arith.constant 0 : index
    %c0_13 = arith.constant 0 : index
    %c0_14 = arith.constant 0 : index
    %7 = vector.load %arg4[%c0_11, %c0_12, %c0_13, %c0_14] : memref<1x4x1x1xf32, #tpu.memory_space<vmem>>, vector<1x4x1x1xf32>
    %8 = vector.shape_cast %7 : vector<1x4x1x1xf32> to vector<1x4x1x1xf32>
    %9 = vector.broadcast %8 : vector<1x4x1x1xf32> to vector<1x4x2x20xf32>
    %c0_15 = arith.constant 0 : index
    %c0_16 = arith.constant 0 : index
    %c0_17 = arith.constant 0 : index
    %c0_18 = arith.constant 0 : index
    %10 = vector.load %arg6[%c0_15, %c0_16, %c0_17, %c0_18] : memref<1x4x20x20xf32, #tpu.memory_space<vmem>>, vector<1x4x2x20xf32>
    tpu.vector_store %arg6[%c0_15, %c0_16, %c0_17, %c0_18], %9 {strides = array<i32>} : memref<1x4x20x20xf32, #tpu.memory_space<vmem>>, vector<1x4x2x20xf32>,
    %c0_19 = arith.constant 0 : index
    %c0_20 = arith.constant 0 : index
    %c18 = arith.constant 18 : index
    %c0_21 = arith.constant 0 : index
    %11 = vector.load %arg6[%c0_19, %c0_20, %c18, %c0_21] : memref<1x4x20x20xf32, #tpu.memory_space<vmem>>, vector<1x4x2x20xf32>
    tpu.vector_store %arg6[%c0_19, %c0_20, %c18, %c0_21], %9 {strides = array<i32>} : memref<1x4x20x20xf32, #tpu.memory_space<vmem>>, vector<1x4x2x20xf32>,
    %12 = vector.shape_cast %7 : vector<1x4x1x1xf32> to vector<1x4x1x1xf32>
    %13 = vector.broadcast %12 : vector<1x4x1x1xf32> to vector<1x4x16x2xf32>
    %c0_22 = arith.constant 0 : index
    %c0_23 = arith.constant 0 : index
    %c2 = arith.constant 2 : index
    %c0_24 = arith.constant 0 : index
    %14 = vector.load %arg6[%c0_22, %c0_23, %c2, %c0_24] : memref<1x4x20x20xf32, #tpu.memory_space<vmem>>, vector<1x4x16x2xf32>
    tpu.vector_store %arg6[%c0_22, %c0_23, %c2, %c0_24], %13 {strides = array<i32>} : memref<1x4x20x20xf32, #tpu.memory_space<vmem>>, vector<1x4x16x2xf32>,
    %c0_25 = arith.constant 0 : index
    %c0_26 = arith.constant 0 : index
    %c2_27 = arith.constant 2 : index
    %c18_28 = arith.constant 18 : index
    %15 = vector.load %arg6[%c0_25, %c0_26, %c2_27, %c18_28] : memref<1x4x20x20xf32, #tpu.memory_space<vmem>>, vector<1x4x16x2xf32>
    tpu.vector_store %arg6[%c0_25, %c0_26, %c2_27, %c18_28], %13 {strides = array<i32>} : memref<1x4x20x20xf32, #tpu.memory_space<vmem>>, vector<1x4x16x2xf32>,
    %c0_29 = arith.constant 0 : index
    %c0_30 = arith.constant 0 : index
    %c2_31 = arith.constant 2 : index
    %c2_32 = arith.constant 2 : index
    %16 = vector.load %arg6[%c0_29, %c0_30, %c2_31, %c2_32] : memref<1x4x20x20xf32, #tpu.memory_space<vmem>>, vector<1x4x16x16xf32>
    tpu.vector_store %arg6[%c0_29, %c0_30, %c2_31, %c2_32], %6 {strides = array<i32>} : memref<1x4x20x20xf32, #tpu.memory_space<vmem>>, vector<1x4x16x16xf32>,
    return
  }
  func.func @transform_0(%arg0: i32, %arg1: i32) -> (i32, i32, i32, i32) {
    %c0_i32 = arith.constant 0 : i32
    %c0_i32_0 = arith.constant 0 : i32
    %c0_i32_1 = arith.constant 0 : i32
    %c0_i32_2 = arith.constant 0 : i32
    return %c0_i32, %arg1, %c0_i32_0, %c0_i32_1 : i32, i32, i32, i32
  }
  func.func @transform_1(%arg0: i32, %arg1: i32) -> (i32, i32, i32, i32) {
    %c0_i32 = arith.constant 0 : i32
    %c0_i32_0 = arith.constant 0 : i32
    %c0_i32_1 = arith.constant 0 : i32
    %c0_i32_2 = arith.constant 0 : i32
    return %c0_i32, %arg1, %c0_i32_0, %c0_i32_1 : i32, i32, i32, i32
  }
  func.func @transform_2(%arg0: i32, %arg1: i32) -> (i32, i32, i32, i32) {
    %c0_i32 = arith.constant 0 : i32
    %c0_i32_0 = arith.constant 0 : i32
    %c0_i32_1 = arith.constant 0 : i32
    %c0_i32_2 = arith.constant 0 : i32
    return %c0_i32, %arg1, %c0_i32_0, %c0_i32_1 : i32, i32, i32, i32
  }
  func.func @transform_3(%arg0: i32, %arg1: i32) -> (i32, i32, i32, i32) {
    %c0_i32 = arith.constant 0 : i32
    %c0_i32_0 = arith.constant 0 : i32
    %c0_i32_1 = arith.constant 0 : i32
    return %arg0, %arg1, %c0_i32, %c0_i32_0 : i32, i32, i32, i32
  }
  func.func @transform_4(%arg0: i32, %arg1: i32) -> (i32, i32, i32, i32) {
    %c0_i32 = arith.constant 0 : i32
    %c0_i32_0 = arith.constant 0 : i32
    %c0_i32_1 = arith.constant 0 : i32
    return %arg0, %arg1, %c0_i32, %c0_i32_0 : i32, i32, i32, i32
  }
}

</mosaic_0001>

<llo_original>
// kernel: tpu_custom_call.1
$region0: #{tpu_custom_call.1}
  #allocation0 [shape = 'u32[]', space=smem, size = 0x4, offset = 0x4, fixed_abs, tag = 'smem constant byte address 0x4 - core index']
  #allocation1 [shape = 'u32[72,128]{1,0:T(1,128)}', space=vmem, size = 0x9000, scoped, tag = 'internal scratch']
  %s0 = inlined_call_operand.vmem [shape: f32[1,4,1,1], index: 0, kind: input, shape index: {}]
  %s1 = inlined_call_operand.vmem [shape: f32[1,4,1,1], index: 1, kind: input, shape index: {}]
  %s2 = inlined_call_operand.vmem [shape: f32[1,4,1,1], index: 2, kind: input, shape index: {}]
  %s3 = inlined_call_operand.hbm [shape: f32[2,4,16,16], index: 3, kind: input, shape index: {}]
  %s4 = inlined_call_operand.vmem [shape: f32[2,4,20,20], index: 4, kind: output, shape index: {}]
  %s5 = sld [smem:[#allocation0]]
  $region53: #{tpu_custom_call.1} parent=0
    _
  %s7 = ssub.s32 1, %s5
  %s8 = scalar_select 0, %s7, %s5
  $region1: #{tpu_custom_call.1} parent=0
    #allocation2 [shape = 'u8[65536]{0}', space=vmem, size = 0x10000, scoped, tag = 'input window, operand 3']
    #allocation3 [shape = 's32[2]{0}', space=sflag, size = 0x8, scoped, tag = 'scoped memory for tpu_custom_call.1']
    %9 = vsyncpa [#allocation3], 0
    %s10 = scalar_lea.sflag [#allocation3], 1
    %11 = vsyncpa %s10, 0
    loop: start=0, step=1, limit=4
    $region2: #{tpu_custom_call.1} parent=1 // loop_pre_header
      _
    $region3: #{tpu_custom_call.1} parent=1 // loop_header
      %s13 = sphi 0, %s17
      %p14 = scmp.ge.s32.totalorder %s13, 4
      %s20 = sphi 0, %s32
      %s21 = sphi 0, %s28
      %s22 = sphi 0, %s20
      %s23 = sphi 0, %s21
      %s24 = sphi 0, %s22
      %s25 = sphi 0, %s23
      %s35 = sphi 0, %s37
      %s38 = sphi 0, %s35
      %s39 = sphi 0, %s38
      %s55 = sphi 0, %s39
      %s61 = sphi 0, %s63
      %s64 = sphi 0, %s61
      %s65 = sphi 0, %s64
      %s81 = sphi 0, %s65
      %s87 = sphi 0, %s89
      %s90 = sphi 0, %s87
      %s91 = sphi 0, %s90
      %s107 = sphi 0, %s91
      %s115 = sphi 0, %s117
      %s118 = sphi 0, %s115
      %s119 = sphi 0, %s118
      %s135 = sphi 0, %s119
      %s143 = sphi 0, %s145
      %s146 = sphi 0, %s143
      %s147 = sphi 0, %s146
      %s163 = sphi 0, %s147
    $region4: #{tpu_custom_call.1} parent=1 // loop_header_branch
      %16 = sbr.rel (%p14) target = $region8
    $region5: #{tpu_custom_call.1} parent=1 // loop_body
      %s18 = ssub.s32 %s13, 1
      %s19 = ssub.s32 %s13, 2
      %s26 = sadd.s32 1, %s21
      %p27 = scmp.ge.s32.totalorder %s26, 1
      %s28 = scalar_select %p27, 0, %s26
      %s29 = sadd.s32 1, %s20
      %s30 = scalar_select %p27, %s29, %s20
      %p31 = scmp.ge.s32.totalorder %s30, 2
      %s32 = scalar_select %p31, 0, %s30
      %s33 = ssub.s32 %s21, %s28
      %p34 = scmp.eq.s32.totalorder %s33, 0
      %s36 = sadd.s32 %s35, 1
      %s37 = scalar_select %p34, %s35, %s36
      %p40 = pneg %p34
      %p41 = scmp.eq.s32.totalorder %s13, 1
      %p42 = por %p40, %p41
      %p43 = scmp.ne.s32.totalorder %s35, %s38
      %p44 = scmp.eq.s32.totalorder %s13, 0
      %p45 = por %p43, %p44
      %p46 = scmp.ne.s32.totalorder %s35, %s38
      %p47 = scmp.eq.s32.totalorder %s18, 1
      %p48 = por %p46, %p47
      %p49 = scmp.ne.s32.totalorder %s38, %s39
      %p50 = scmp.eq.s32.totalorder %s18, 0
      %p51 = por %p49, %p50
      %p52 = scmp.ne.s32.totalorder %s38, %s39
      %p53 = scmp.eq.s32.totalorder %s19, 1
      %p54 = por %p52, %p53
      %p56 = scmp.ne.s32.totalorder %s39, %s55
      %p57 = scmp.eq.s32.totalorder %s19, 0
      %p58 = por %p56, %p57
      %s59 = ssub.s32 %s21, %s28
      %p60 = scmp.eq.s32.totalorder %s59, 0
      %s62 = sadd.s32 %s61, 1
      %s63 = scalar_select %p60, %s61, %s62
      %p66 = pneg %p60
      %p67 = scmp.eq.s32.totalorder %s13, 1
      %p68 = por %p66, %p67
      %p69 = scmp.ne.s32.totalorder %s61, %s64
      %p70 = scmp.eq.s32.totalorder %s13, 0
      %p71 = por %p69, %p70
      %p72 = scmp.ne.s32.totalorder %s61, %s64
      %p73 = scmp.eq.s32.totalorder %s18, 1
      %p74 = por %p72, %p73
      %p75 = scmp.ne.s32.totalorder %s64, %s65
      %p76 = scmp.eq.s32.totalorder %s18, 0
      %p77 = por %p75, %p76
      %p78 = scmp.ne.s32.totalorder %s64, %s65
      %p79 = scmp.eq.s32.totalorder %s19, 1
      %p80 = por %p78, %p79
      %p82 = scmp.ne.s32.totalorder %s65, %s81
      %p83 = scmp.eq.s32.totalorder %s19, 0
      %p84 = por %p82, %p83
      %s85 = ssub.s32 %s21, %s28
      %p86 = scmp.eq.s32.totalorder %s85, 0
      %s88 = sadd.s32 %s87, 1
      %s89 = scalar_select %p86, %s87, %s88
      %p92 = pneg %p86
      %p93 = scmp.eq.s32.totalorder %s13, 1
      %p94 = por %p92, %p93
      %p95 = scmp.ne.s32.totalorder %s87, %s90
      %p96 = scmp.eq.s32.totalorder %s13, 0
      %p97 = por %p95, %p96
      %p98 = scmp.ne.s32.totalorder %s87, %s90
      %p99 = scmp.eq.s32.totalorder %s18, 1
      %p100 = por %p98, %p99
      %p101 = scmp.ne.s32.totalorder %s90, %s91
      %p102 = scmp.eq.s32.totalorder %s18, 0
      %p103 = por %p101, %p102
      %p104 = scmp.ne.s32.totalorder %s90, %s91
      %p105 = scmp.eq.s32.totalorder %s19, 1
      %p106 = por %p104, %p105
      %p108 = scmp.ne.s32.totalorder %s91, %s107
      %p109 = scmp.eq.s32.totalorder %s19, 0
      %p110 = por %p108, %p109
      %s111 = ssub.s32 %s20, %s32
      %s112 = ssub.s32 %s21, %s28
      %s113 = sor.u32 %s111, %s112
      %p114 = scmp.eq.s32.totalorder %s113, 0
      %s116 = sadd.s32 %s115, 1
      %s117 = scalar_select %p114, %s115, %s116
      %p120 = pneg %p114
      %p121 = scmp.eq.s32.totalorder %s13, 1
      %p122 = por %p120, %p121
      %p123 = scmp.ne.s32.totalorder %s115, %s118
      %p124 = scmp.eq.s32.totalorder %s13, 0
      %p125 = por %p123, %p124
      %p126 = scmp.ne.s32.totalorder %s115, %s118
      %p127 = scmp.eq.s32.totalorder %s18, 1
      %p128 = por %p126, %p127
      %p129 = scmp.ne.s32.totalorder %s118, %s119
      %p130 = scmp.eq.s32.totalorder %s18, 0
      %p131 = por %p129, %p130
      %p132 = scmp.ne.s32.totalorder %s118, %s119
      %p133 = scmp.eq.s32.totalorder %s19, 1
      %p134 = por %p132, %p133
      %p136 = scmp.ne.s32.totalorder %s119, %s135
      %p137 = scmp.eq.s32.totalorder %s19, 0
      %p138 = por %p136, %p137
      %s139 = ssub.s32 %s20, %s32
      %s140 = ssub.s32 %s21, %s28
      %s141 = sor.u32 %s139, %s140
      %p142 = scmp.eq.s32.totalorder %s141, 0
      %s144 = sadd.s32 %s143, 1
      %s145 = scalar_select %p142, %s143, %s144
      %p148 = pneg %p142
      %p149 = scmp.eq.s32.totalorder %s13, 1
      %p150 = por %p148, %p149
      %p151 = scmp.ne.s32.totalorder %s143, %s146
      %p152 = scmp.eq.s32.totalorder %s13, 0
      %p153 = por %p151, %p152
      %p154 = scmp.ne.s32.totalorder %s143, %s146
      %p155 = scmp.eq.s32.totalorder %s18, 1
      %p156 = por %p154, %p155
      %p157 = scmp.ne.s32.totalorder %s146, %s147
      %p158 = scmp.eq.s32.totalorder %s18, 0
      %p159 = por %p157, %p158
      %p160 = scmp.ne.s32.totalorder %s146, %s147
      %p161 = scmp.eq.s32.totalorder %s19, 1
      %p162 = por %p160, %p161
      %p164 = scmp.ne.s32.totalorder %s147, %s163
      %p165 = scmp.eq.s32.totalorder %s19, 0
      %p166 = por %p164, %p165
      %p167 = scmp.le.s32.totalorder 1, %s13
      %p168 = scmp.lt.s32.totalorder %s13, 3
      %p169 = pnand %p167, %p168
      %p170 = pneg %p169
      // Predicated region
      $region9: #{tpu_custom_call.1} parent=5 // pred_check
        _
      $region10: #{tpu_custom_call.1} parent=5 // pred_check_branch
        %172 = sbr.rel (%p169) target = $region12
      $region11: #{tpu_custom_call.1} parent=5 // pred_region
        %s173 = ssub.s32 %s13, 1
        // Predicated region
        $region13: #{tpu_custom_call.1} parent=11 // pred_check
          %p174 = pneg %p51
        $region14: #{tpu_custom_call.1} parent=11 // pred_check_branch
          %176 = sbr.rel (%p174) target = $region16
        $region15: #{tpu_custom_call.1} parent=11 // pred_region
          %s177 = smul.u32 4, %s23
          %p178 = scmp.lt.s32.totalorder %s177, 3
          %s179 = scalar_select %p178, %s177, 3
          %s180 = scalar_lea.vmem %s0, %s179
          %s181 = smul.u32 4, %s23
        $region16: #{tpu_custom_call.1} parent=11 // pred_fallthru
          _
        // Predicated region
        $region17: #{tpu_custom_call.1} parent=11 // pred_check
          %p182 = pneg %p77
        $region18: #{tpu_custom_call.1} parent=11 // pred_check_branch
          %184 = sbr.rel (%p182) target = $region20
        $region19: #{tpu_custom_call.1} parent=11 // pred_region
          %s185 = smul.u32 4, %s23
          %p186 = scmp.lt.s32.totalorder %s185, 3
          %s187 = scalar_select %p186, %s185, 3
          %s188 = scalar_lea.vmem %s1, %s187
          %s189 = smul.u32 4, %s23
        $region20: #{tpu_custom_call.1} parent=11 // pred_fallthru
          _
        // Predicated region
        $region21: #{tpu_custom_call.1} parent=11 // pred_check
          %p190 = pneg %p103
        $region22: #{tpu_custom_call.1} parent=11 // pred_check_branch
          %192 = sbr.rel (%p190) target = $region24
        $region23: #{tpu_custom_call.1} parent=11 // pred_region
          %s193 = smul.u32 4, %s23
          %p194 = scmp.lt.s32.totalorder %s193, 3
          %s195 = scalar_select %p194, %s193, 3
          %s196 = scalar_lea.vmem %s2, %s195
          %s197 = smul.u32 4, %s23
        $region24: #{tpu_custom_call.1} parent=11 // pred_fallthru
          _
      $region12: #{tpu_custom_call.1} parent=5 // pred_fallthru
        _
      %p198 = scmp.lt.s32.totalorder %s13, 2
      // Predicated region
      $region25: #{tpu_custom_call.1} parent=5 // pred_check
        %p199 = pneg %p198
      $region26: #{tpu_custom_call.1} parent=5 // pred_check_branch
        %201 = sbr.rel (%p199) target = $region28
      $region27: #{tpu_custom_call.1} parent=5 // pred_region
        // Predicated region
        $region29: #{tpu_custom_call.1} parent=27 // pred_check
          %p202 = pneg %p125
        $region30: #{tpu_custom_call.1} parent=27 // pred_check_branch
          %204 = sbr.rel (%p202) target = $region32
        $region31: #{tpu_custom_call.1} parent=27 // pred_region
          %s205 = sand.u32 %s115, 1
          %s206 = scalar_lea.sflag [#allocation3], %s205
          %s207 = sand.u32 %s115, 1
          %s208 = smul.addr %s207, 64
          %s209 = scalar_lea.vmem [#allocation2], %s208
          %s210 = smul.u32 4, %s21
          %212 = vsyncadd %s206, 0
          %s213 = smul.addr %s210, 2
          %s214 = smul.addr %s20, 8
          %s215 = sadd.s32 %s213, %s214
          %s216 = smul.addr %s215, 8
          %s217 = scalar_lea.hbm %s3, %s216
          %s218 = sshll.u32 %s217, 4
          %s219 = int_to_ptr.hbm [resolvable:$true] %s218
          %s220 = sshll.u32 %s209, 4
          %s221 = int_to_ptr.vmem [resolvable:$true] %s220
          %226 = dma.hbm_to_vmem [thread:$0]  %s219, 1024, %s221, %s206, 128, 128, 8
        $region32: #{tpu_custom_call.1} parent=27 // pred_fallthru
          _
      $region28: #{tpu_custom_call.1} parent=5 // pred_fallthru
        _
      %p227 = scmp.le.s32.totalorder 1, %s13
      %p228 = scmp.lt.s32.totalorder %s13, 3
      %p229 = pnand %p227, %p228
      %p230 = pneg %p229
      // Predicated region
      $region33: #{tpu_custom_call.1} parent=5 // pred_check
        _
      $region34: #{tpu_custom_call.1} parent=5 // pred_check_branch
        %232 = sbr.rel (%p229) target = $region36
      $region35: #{tpu_custom_call.1} parent=5 // pred_region
        %s233 = ssub.s32 %s13, 1
        %s234 = sand.u32 %s118, 1
        %s235 = scalar_lea.sflag [#allocation3], %s234
        %s236 = sand.u32 %s118, 1
        %s237 = smul.addr %s236, 64
        %s238 = scalar_lea.vmem [#allocation2], %s237
        // Predicated region
        $region37: #{tpu_custom_call.1} parent=35 // pred_check
          %p239 = pneg %p131
        $region38: #{tpu_custom_call.1} parent=35 // pred_check_branch
          %241 = sbr.rel (%p239) target = $region40
        $region39: #{tpu_custom_call.1} parent=35 // pred_region
          %243 = dma.done %s235, 1024
        $region40: #{tpu_custom_call.1} parent=35 // pred_fallthru
          _
        %s244 = smul.u32 4, %s23
        %p245 = scmp.lt.s32.totalorder %s244, 3
        %s246 = scalar_select %p245, %s244, 3
        %s247 = scalar_lea.vmem %s0, %s246
        %p248 = pneg %p51
        %p249 = pneg %p48
        %s250 = smul.u32 4, %s23
        %p251 = scmp.lt.s32.totalorder %s250, 3
        %s252 = scalar_select %p251, %s250, 3
        %s253 = scalar_lea.vmem %s1, %s252
        %p254 = pneg %p77
        %p255 = pneg %p74
        %s256 = smul.u32 4, %s23
        %p257 = scmp.lt.s32.totalorder %s256, 3
        %s258 = scalar_select %p257, %s256, 3
        %s259 = scalar_lea.vmem %s2, %s258
        %p260 = pneg %p103
        %p261 = pneg %p100
        %s262 = sand.u32 %s118, 1
        %s263 = scalar_lea.sflag [#allocation3], %s262
        %s264 = sand.u32 %s118, 1
        %s265 = smul.addr %s264, 64
        %s266 = scalar_lea.vmem [#allocation2], %s265
        %p267 = pneg %p131
        %p268 = pneg %p128
        %p269 = pneg %p159
        %p270 = pneg %p156
        %s271 = smul.u32 4, %s23
        %p272 = scmp.lt.s32.totalorder %s22, 1
        %s273 = scalar_select %p272, %s22, 1
        %p274 = scmp.lt.s32.totalorder %s271, 3
        %s275 = scalar_select %p274, %s271, 3
        %s276 = smul.addr %s275, 3
        %s277 = smul.addr %s273, 12
        %s278 = sadd.s32 %s276, %s277
        %s279 = smul.addr %s278, 8
        %s280 = scalar_lea.vmem %s4, %s279
        %s281 = smul.u32 4, %s23
        %p282 = scmp.lt.s32.totalorder %s281, 3
        %s283 = scalar_select %p282, %s281, 3
        %s284 = scalar_lea.vmem %s0, %s283
        %s285 = smul.u32 4, %s23
        %s286 = smul.u32 4, %s23
        %p287 = scmp.lt.s32.totalorder %s286, 3
        %s288 = scalar_select %p287, %s286, 3
        %s289 = scalar_lea.vmem %s1, %s288
        %s290 = smul.u32 4, %s23
        %s291 = smul.u32 4, %s23
        %p292 = scmp.lt.s32.totalorder %s291, 3
        %s293 = scalar_select %p292, %s291, 3
        %s294 = scalar_lea.vmem %s2, %s293
        %s295 = smul.u32 4, %s23
        %s296 = smul.u32 4, %s23
        %s297 = smul.u32 4, %s23
        %p298 = scmp.lt.s32.totalorder %s22, 1
        %s299 = scalar_select %p298, %s22, 1
        %p300 = scmp.lt.s32.totalorder %s297, 3
        %s301 = scalar_select %p300, %s297, 3
        %s302 = smul.addr %s301, 3
        %s303 = smul.addr %s299, 12
        %s304 = sadd.s32 %s302, %s303
        %s305 = smul.addr %s304, 8
        %s306 = scalar_lea.vmem %s4, %s305
        %s307 = smul.u32 4, %s23
        %v308 = vld [vmem:[%s238] sm:$0xff]
        %v309 = vld [vmem:[%s238 + $0x8] sm:$0xff]
        %v310 = vld [vmem:[%s238 + $0x10] sm:$0xff]
        %v311 = vld [vmem:[%s238 + $0x18] sm:$0xff]
        %v312 = vld [vmem:[%s238 + $0x20] sm:$0xff]
        %v313 = vld [vmem:[%s238 + $0x28] sm:$0xff]
        %v314 = vld [vmem:[%s238 + $0x30] sm:$0xff]
        %v315 = vld [vmem:[%s238 + $0x38] sm:$0xff]
        %v316 = vld [vmem:[%s284] sm:$0x1]
        %v317 = vld [vmem:[%s284 + $0x1] sm:$0x1]
        %v318 = vld [vmem:[%s284 + $0x2] sm:$0x1]
        %v319 = vld [vmem:[%s284 + $0x3] sm:$0x1]
        %v324 = vperm.slane %v316, 0
        %v325 = vperm.slane %v317, 0
        %v326 = vperm.slane %v318, 0
        %v327 = vperm.slane %v319, 0
        %328 = vset.pattern.permute.xlu0 0
        %329 = vperm.xlu0 %328, %v324
        %v330 = vpop.permute.xlu0 %329
        %332 = vset.pattern.permute.xlu0 0
        %333 = vperm.xlu0 %332, %v325
        %v334 = vpop.permute.xlu0 %333
        %336 = vset.pattern.permute.xlu0 0
        %337 = vperm.xlu0 %336, %v326
        %v338 = vpop.permute.xlu0 %337
        %340 = vset.pattern.permute.xlu0 0
        %341 = vperm.xlu0 %340, %v327
        %v342 = vpop.permute.xlu0 %341
        %v344 = vmul.f32 %v308, %v330
        %v345 = vmul.f32 %v309, %v330
        %v346 = vmul.f32 %v310, %v334
        %v347 = vmul.f32 %v311, %v334
        %v348 = vmul.f32 %v312, %v338
        %v349 = vmul.f32 %v313, %v338
        %v350 = vmul.f32 %v314, %v342
        %v351 = vmul.f32 %v315, %v342
        %v352 = vld [vmem:[%s289] sm:$0x1]
        %v353 = vld [vmem:[%s289 + $0x1] sm:$0x1]
        %v354 = vld [vmem:[%s289 + $0x2] sm:$0x1]
        %v355 = vld [vmem:[%s289 + $0x3] sm:$0x1]
        %v360 = vperm.slane %v352, 0
        %v361 = vperm.slane %v353, 0
        %v362 = vperm.slane %v354, 0
        %v363 = vperm.slane %v355, 0
        %364 = vset.pattern.permute.xlu0 0
        %365 = vperm.xlu0 %364, %v360
        %v366 = vpop.permute.xlu0 %365
        %368 = vset.pattern.permute.xlu0 0
        %369 = vperm.xlu0 %368, %v361
        %v370 = vpop.permute.xlu0 %369
        %372 = vset.pattern.permute.xlu0 0
        %373 = vperm.xlu0 %372, %v362
        %v374 = vpop.permute.xlu0 %373
        %376 = vset.pattern.permute.xlu0 0
        %377 = vperm.xlu0 %376, %v363
        %v378 = vpop.permute.xlu0 %377
        %v380 = vadd.f32 %v344, %v366
        %v381 = vadd.f32 %v345, %v366
        %v382 = vadd.f32 %v346, %v370
        %v383 = vadd.f32 %v347, %v370
        %v384 = vadd.f32 %v348, %v374
        %v385 = vadd.f32 %v349, %v374
        %v386 = vadd.f32 %v350, %v378
        %v387 = vadd.f32 %v351, %v378
        %v388 = vld [vmem:[%s294] sm:$0x1]
        %v389 = vld [vmem:[%s294 + $0x1] sm:$0x1]
        %v390 = vld [vmem:[%s294 + $0x2] sm:$0x1]
        %v391 = vld [vmem:[%s294 + $0x3] sm:$0x1]
        %v396 = vperm.slane %v388, 0
        %v397 = vperm.slane %v389, 0
        %v398 = vperm.slane %v390, 0
        %v399 = vperm.slane %v391, 0
        %400 = vset.pattern.permute.xlu0 0
        %401 = vperm.xlu0 %400, %v396
        %v402 = vpop.permute.xlu0 %401
        %404 = vset.pattern.permute.xlu0 0
        %405 = vperm.xlu0 %404, %v397
        %v406 = vpop.permute.xlu0 %405
        %408 = vset.pattern.permute.xlu0 0
        %409 = vperm.xlu0 %408, %v398
        %v410 = vpop.permute.xlu0 %409
        %412 = vset.pattern.permute.xlu0 0
        %413 = vperm.xlu0 %412, %v399
        %v414 = vpop.permute.xlu0 %413
        %vm416 = vcmask 156672
        %417 = vst.msk [vmem:[%s306] sm:$0x3] %vm416, %v402
        %418 = vst.msk [vmem:[%s306 + $0x18] sm:$0x3] %vm416, %v406
        %419 = vst.msk [vmem:[%s306 + $0x30] sm:$0x3] %vm416, %v410
        %420 = vst.msk [vmem:[%s306 + $0x48] sm:$0x3] %vm416, %v414
        %421 = vst.msk [vmem:[%s306 + $0x12] sm:$0x3] %vm416, %v402
        %422 = vst.msk [vmem:[%s306 + $0x2a] sm:$0x3] %vm416, %v406
        %423 = vst.msk [vmem:[%s306 + $0x42] sm:$0x3] %vm416, %v410
        %424 = vst.msk [vmem:[%s306 + $0x5a] sm:$0x3] %vm416, %v414
        %vm425 = vcmask 15360
        %426 = vst.msk [vmem:[%s306 + $0x2] sm:$0xff] %vm425, %v402
        %427 = vst.msk [vmem:[%s306 + $0xa] sm:$0xff] %vm425, %v402
        %428 = vst.msk [vmem:[%s306 + $0x1a] sm:$0xff] %vm425, %v406
        %429 = vst.msk [vmem:[%s306 + $0x22] sm:$0xff] %vm425, %v406
        %430 = vst.msk [vmem:[%s306 + $0x32] sm:$0xff] %vm425, %v410
        %431 = vst.msk [vmem:[%s306 + $0x3a] sm:$0xff] %vm425, %v410
        %432 = vst.msk [vmem:[%s306 + $0x4a] sm:$0xff] %vm425, %v414
        %433 = vst.msk [vmem:[%s306 + $0x52] sm:$0xff] %vm425, %v414
        %vm434 = vcmask 162960
        %435 = vst.msk [vmem:[%s306 + $0x2] sm:$0xff] %vm434, %v402
        %436 = vst.msk [vmem:[%s306 + $0xa] sm:$0xff] %vm434, %v402
        %437 = vst.msk [vmem:[%s306 + $0x1a] sm:$0xff] %vm434, %v406
        %438 = vst.msk [vmem:[%s306 + $0x22] sm:$0xff] %vm434, %v406
        %439 = vst.msk [vmem:[%s306 + $0x32] sm:$0xff] %vm434, %v410
        %440 = vst.msk [vmem:[%s306 + $0x3a] sm:$0xff] %vm434, %v410
        %441 = vst.msk [vmem:[%s306 + $0x4a] sm:$0xff] %vm434, %v414
        %442 = vst.msk [vmem:[%s306 + $0x52] sm:$0xff] %vm434, %v414
        %451 = vrot.lane.b32.xlu0 %v380, 2
        %v452 = vpop.permute.xlu0 %451
        %453 = vrot.lane.b32.xlu0 %v381, 2
        %v454 = vpop.permute.xlu0 %453
        %455 = vrot.lane.b32.xlu0 %v382, 2
        %v456 = vpop.permute.xlu0 %455
        %457 = vrot.lane.b32.xlu0 %v383, 2
        %v458 = vpop.permute.xlu0 %457
        %459 = vrot.lane.b32.xlu0 %v384, 2
        %v460 = vpop.permute.xlu0 %459
        %461 = vrot.lane.b32.xlu0 %v385, 2
        %v462 = vpop.permute.xlu0 %461
        %463 = vrot.lane.b32.xlu0 %v386, 2
        %v464 = vpop.permute.xlu0 %463
        %465 = vrot.lane.b32.xlu0 %v387, 2
        %v466 = vpop.permute.xlu0 %465
        %vm475 = vcmask 146448
        %476 = vst.msk [vmem:[%s306 + $0x2] sm:$0xff] %vm475, %v452
        %477 = vst.msk [vmem:[%s306 + $0xa] sm:$0xff] %vm475, %v454
        %478 = vst.msk [vmem:[%s306 + $0x1a] sm:$0xff] %vm475, %v456
        %479 = vst.msk [vmem:[%s306 + $0x22] sm:$0xff] %vm475, %v458
        %480 = vst.msk [vmem:[%s306 + $0x32] sm:$0xff] %vm475, %v460
        %481 = vst.msk [vmem:[%s306 + $0x3a] sm:$0xff] %vm475, %v462
        %482 = vst.msk [vmem:[%s306 + $0x4a] sm:$0xff] %vm475, %v464
        %483 = vst.msk [vmem:[%s306 + $0x52] sm:$0xff] %vm475, %v466
        %s484 = smul.u32 4, %s23
        %p485 = scmp.lt.s32.totalorder %s22, 1
        %s486 = scalar_select %p485, %s22, 1
        %p487 = scmp.lt.s32.totalorder %s484, 3
        %s488 = scalar_select %p487, %s484, 3
        %s489 = smul.addr %s488, 3
        %s490 = smul.addr %s486, 12
        %s491 = sadd.s32 %s489, %s490
        %s492 = smul.addr %s491, 8
        %s493 = scalar_lea.vmem %s4, %s492
        // Predicated region
        $region41: #{tpu_custom_call.1} parent=35 // pred_check
          %p494 = pneg %p156
        $region42: #{tpu_custom_call.1} parent=35 // pred_check_branch
          %496 = sbr.rel (%p494) target = $region44
        $region43: #{tpu_custom_call.1} parent=35 // pred_region
          %s497 = smul.u32 4, %s23
        $region44: #{tpu_custom_call.1} parent=35 // pred_fallthru
          _
      $region36: #{tpu_custom_call.1} parent=5 // pred_fallthru
        _
      %p498 = scmp.le.s32.totalorder 2, %s13
      // Predicated region
      $region45: #{tpu_custom_call.1} parent=5 // pred_check
        %p499 = pneg %p498
      $region46: #{tpu_custom_call.1} parent=5 // pred_check_branch
        %501 = sbr.rel (%p499) target = $region48
      $region47: #{tpu_custom_call.1} parent=5 // pred_region
        %s502 = ssub.s32 %s13, 2
        // Predicated region
        $region49: #{tpu_custom_call.1} parent=47 // pred_check
          %p503 = pneg %p162
        $region50: #{tpu_custom_call.1} parent=47 // pred_check_branch
          %505 = sbr.rel (%p503) target = $region52
        $region51: #{tpu_custom_call.1} parent=47 // pred_region
          %s506 = smul.u32 4, %s25
          %p507 = scmp.lt.s32.totalorder %s24, 1
          %s508 = scalar_select %p507, %s24, 1
          %p509 = scmp.lt.s32.totalorder %s506, 3
          %s510 = scalar_select %p509, %s506, 3
          %s511 = smul.addr %s510, 3
          %s512 = smul.addr %s508, 12
          %s513 = sadd.s32 %s511, %s512
          %s514 = smul.addr %s513, 8
          %s515 = scalar_lea.vmem %s4, %s514
        $region52: #{tpu_custom_call.1} parent=47 // pred_fallthru
          _
      $region48: #{tpu_custom_call.1} parent=5 // pred_fallthru
        _
    $region6: #{tpu_custom_call.1} parent=1 // loop_footer
      %s17 = sadd.s32 1, %s13
    $region7: #{tpu_custom_call.1} parent=1 // loop_footer_branch
      %12 = sbr.rel target = $region3
    $region8: #{tpu_custom_call.1} parent=1 // loop_exit
      _
    %516 = vsyncpa [#allocation3], 1
    %s517 = scalar_lea.sflag [#allocation3], 1
    %518 = vsyncpa %s517, 1

</llo_original>
